<compile_context>
chip_gen: v5e
topology: v5e:2x2
jax: 0.10.0
libtpu: 0.0.40
codegen_flags: <defaults>
</compile_context>

<pallas_src>
import numpy as np
import jax
import jax.numpy as jnp
from jax.experimental import pallas as pl
from jax.experimental.pallas import tpu as pltpu

LANE_WIDTH = 512  # lane-dense packing width: multiple of 128 lanes


def _round_up(x: int, m: int) -> int:
    return ((x + m - 1) // m) * m


def _pick_row_tile(n_rows: int, row_tile: int) -> int:
    """Large tiles to amortize per-grid-step overhead (~0.35us/step), but keep
    >= 8 grid steps (megacore sharding on v7x) when there is enough work.
    Tiles stay a multiple of 8 sublanes and never drop below 256 rows."""
    tm = min(row_tile, _round_up(max(n_rows, 1), 8))
    while tm >= 512 and pl.cdiv(n_rows, tm) < 8:
        tm //= 2
    return max(8, tm)


def _swish_kernel(x_ref, o_ref):
    x = x_ref[...].astype(jnp.float32)
    sig = 1.0 / (1.0 + jnp.exp(-x))  # exp -> EUP slot; mul/add -> VPU; all hidden behind DMA
    o_ref[...] = (x * sig).astype(o_ref.dtype)


def swish_feature_map(x, *, row_tile=1024, lane_width=LANE_WIDTH):
    """Elementwise swish(x) = x * sigmoid(x); shape- and dtype-preserving."""
    orig_shape = x.shape
    n = int(np.prod(orig_shape)) if orig_shape else 1
    if n == 0:
        return x

    flat = x.reshape(-1)

    C = lane_width
    n_rows = pl.cdiv(n, C)
    tm = _pick_row_tile(n_rows, row_tile)

    total = n_rows * C
    if total > n:
        # Only pad up to a full lane row (< 512 elems); swish(0) == 0 and the
        # tail is sliced off, so zero-padding is safe.  The ragged last row
        # TILE is handled by Pallas' masked boundary block, not by padding.
        flat = jnp.pad(flat, (0, total - n))
    x2 = flat.reshape(n_rows, C)

    grid = (pl.cdiv(n_rows, tm),)

    out2 = pl.pallas_call(
        _swish_kernel,
        out_shape=jax.ShapeDtypeStruct((n_rows, C), x.dtype),
        grid_spec=pltpu.PrefetchScalarGridSpec(
            num_scalar_prefetch=0,
            grid=grid,
            in_specs=[pl.BlockSpec((tm, C), lambda i: (i, 0))],
            out_specs=pl.BlockSpec((tm, C), lambda i: (i, 0)),
        ),
        compiler_params=pltpu.CompilerParams(
            dimension_semantics=("parallel",),
        ),
    )(x2)

    out_flat = out2.reshape(-1)
    if total > n:
        out_flat = out_flat[:n]
    return out_flat.reshape(orig_shape)


def _reference(x):
    """Pure-JAX reference mirroring torch swish/SiLU: x * sigmoid(x)."""
    xf = x.astype(jnp.float32)
    return (xf * (1.0 / (1.0 + jnp.exp(-xf)))).astype(x.dtype)


if __name__ == "__main__":
    key = jax.random.PRNGKey(0)

    # Shape consistent with the feature-map usage: (batch, heads, seq, head_dim).
    B, H, T, D = 2, 4, 8, 16
    x = jax.random.normal(key, (B, H, T, D), dtype=jnp.float32)

    out = jax.block_until_ready(swish_feature_map(x))
    ref = _reference(x)
    assert out.shape == x.shape, out.shape
    assert out.dtype == x.dtype, out.dtype
    np.testing.assert_allclose(np.asarray(out), np.asarray(ref), atol=1e-6, rtol=1e-6)

    # Ragged / non-lane-aligned shape to exercise the padding + masked-tail path.
    key2 = jax.random.PRNGKey(0)
    y = jax.random.normal(key2, (3, 5, 7), dtype=jnp.float32)
    out_y = jax.block_until_ready(swish_feature_map(y))
    np.testing.assert_allclose(np.asarray(out_y), np.asarray(_reference(y)),
                               atol=1e-6, rtol=1e-6)

    print("KERNEL_OK")
</pallas_src>

<mosaic_0001>
module attributes {stable_mosaic.version = 11 : i64} {
  func.func @_swish_kernel(%arg0: i32, %arg1: memref<8x512xf32, #tpu.memory_space<vmem>>, %arg2: memref<8x512xf32, #tpu.memory_space<vmem>>) attributes {dimension_semantics = [#tpu.dimension_semantics<parallel>], iteration_bounds = array<i64: 1>, scalar_prefetch = 0 : i64, scratch_operands = 0 : i64, tpu.core_type = #tpu.core_type<tc>, window_params = [{transform_indices = @transform_0, window_bounds = array<i64: 8, 512>}, {transform_indices = @transform_1, window_bounds = array<i64: 8, 512>}]} {
    %c0 = arith.constant 0 : index
    %c0_0 = arith.constant 0 : index
    %0 = vector.load %arg1[%c0, %c0_0] : memref<8x512xf32, #tpu.memory_space<vmem>>, vector<8x512xf32>
    %cst = arith.constant 0.000000e+00 : f32
    %1 = vector.broadcast %cst : f32 to vector<8x512xf32>
    %2 = arith.subf %1, %0 : vector<8x512xf32>
    %3 = math.exp %2 : vector<8x512xf32>
    %cst_1 = arith.constant 1.000000e+00 : f32
    %4 = vector.broadcast %cst_1 : f32 to vector<8x512xf32>
    %5 = arith.addf %4, %3 : vector<8x512xf32>
    %cst_2 = arith.constant 1.000000e+00 : f32
    %6 = vector.broadcast %cst_2 : f32 to vector<8x512xf32>
    %7 = arith.divf %6, %5 : vector<8x512xf32>
    %8 = arith.mulf %0, %7 : vector<8x512xf32>
    %c0_3 = arith.constant 0 : index
    %c0_4 = arith.constant 0 : index
    %9 = vector.load %arg2[%c0_3, %c0_4] : memref<8x512xf32, #tpu.memory_space<vmem>>, vector<8x512xf32>
    tpu.vector_store %arg2[%c0_3, %c0_4], %8 {strides = array<i32>} : memref<8x512xf32, #tpu.memory_space<vmem>>, vector<8x512xf32>,
    return
  }
  func.func @transform_0(%arg0: i32) -> (i32, i32) {
    %c0_i32 = arith.constant 0 : i32
    %c0_i32_0 = arith.constant 0 : i32
    return %arg0, %c0_i32 : i32, i32
  }
  func.func @transform_1(%arg0: i32) -> (i32, i32) {
    %c0_i32 = arith.constant 0 : i32
    %c0_i32_0 = arith.constant 0 : i32
    return %arg0, %c0_i32 : i32, i32
  }
}

</mosaic_0001>

<llo_original>
// kernel: tpu_custom_call.1
$region0: #{tpu_custom_call.1}
  #allocation0 [shape = 'u32[]', space=smem, size = 0x4, offset = 0x4, fixed_abs, tag = 'smem constant byte address 0x4 - core index']
  #allocation1 [shape = 'u32[72,128]{1,0:T(1,128)}', space=vmem, size = 0x9000, scoped, tag = 'internal scratch']
  %s0 = inlined_call_operand.hbm [shape: f32[2,512], index: 0, kind: input, shape index: {}]
  %s1 = inlined_call_operand.hbm [shape: f32[2,512], index: 1, kind: output, shape index: {}]
  %s2 = sld [smem:[#allocation0]]
  $region18: #{tpu_custom_call.1} parent=0
    _
  %s4 = ssub.s32 1, %s2
  %s5 = scalar_select 0, %s4, %s2
  $region1: #{tpu_custom_call.1} parent=0
    #allocation2 [shape = 'u8[16384]{0}', space=vmem, size = 0x4000, scoped, tag = 'input window, operand 0, single buffered']
    #allocation3 [shape = 's32[1]{0}', space=sflag, size = 0x4, scoped, tag = 'scoped memory for tpu_custom_call.1']
    #allocation4 [shape = 's32[1]{0}', space=sflag, size = 0x4, scoped, tag = 'scoped memory for tpu_custom_call.1']
    #allocation5 [shape = 'u8[16384]{0}', space=vmem, size = 0x4000, scoped, tag = 'output window, operand 0, single buffered']
    %6 = vsyncpa [#allocation3], 0
    %7 = vsyncpa [#allocation4], 0
    // Predicated region
    $region2: #{tpu_custom_call.1} parent=1 // pred_check
      _
    $region3: #{tpu_custom_call.1} parent=1 // pred_check_branch
      %9 = sbr.rel (0) target = $region5
    $region4: #{tpu_custom_call.1} parent=1 // pred_region
      %11 = vsyncadd [#allocation3], 384
      %s12 = sshll.u32 %s0, 4
      %s13 = int_to_ptr.hbm [resolvable:$true] %s12
      %s14 = sshll.u32 [#allocation2], 4
      %s15 = int_to_ptr.vmem [resolvable:$true] %s14
      %20 = dma.hbm_to_vmem [thread:$0]  %s13, 128, %s15, [#allocation3], 128, 128, 8
    $region5: #{tpu_custom_call.1} parent=1 // pred_fallthru
      _
    // Predicated region
    $region6: #{tpu_custom_call.1} parent=1 // pred_check
      _
    $region7: #{tpu_custom_call.1} parent=1 // pred_check_branch
      %22 = sbr.rel (0) target = $region9
    $region8: #{tpu_custom_call.1} parent=1 // pred_region
      %24 = dma.done [#allocation3], 512
    $region9: #{tpu_custom_call.1} parent=1 // pred_fallthru
      _
    %v25 = vld [vmem:[#allocation2] sm:$0xff]
    %v26 = vld [vmem:[#allocation2 + $0x8] sm:$0xff]
    %v27 = vld [vmem:[#allocation2 + $0x10] sm:$0xff]
    %v28 = vld [vmem:[#allocation2 + $0x18] sm:$0xff]
    %v29 = vsub.f32 0.0, %v25
    %v30 = vsub.f32 0.0, %v26
    %v31 = vsub.f32 0.0, %v27
    %v32 = vsub.f32 0.0, %v28
    %v33 = vmul.f32 %v29, 1.442695
    %v34 = vpow.pop %v33
    %v35 = vmul.f32 %v30, 1.442695
    %v36 = vpow.pop %v35
    %v37 = vmul.f32 %v31, 1.442695
    %v38 = vpow.pop %v37
    %v39 = vmul.f32 %v32, 1.442695
    %v40 = vpow.pop %v39
    %v41 = vadd.f32 %v34, 1.0
    %v42 = vadd.f32 %v36, 1.0
    %v43 = vadd.f32 %v38, 1.0
    %v44 = vadd.f32 %v40, 1.0
    %v45 = vrcp.pop %v41
    %v46 = vmul.f32 %v41, %v45
    %v47 = vsub.f32 1.0, %v46
    %v48 = vmul.f32 %v45, %v47
    %v49 = vadd.f32 %v45, %v48
    %vm50 = vweird.f32 %v41
    %vm51 = vweird.f32 %v45
    %vm52 = vmor %vm50, %vm51
    %v53 = vsel %vm52, %v45, %v49
    %v54 = vand.u32 2147483647, %v41
    %vm55 = vcmp.eq.f32.partialorder %v54, 8.507059e+37
    %v56 = vand.u32 %v41, 2147483648
    %v57 = vor.u32 1.1754944e-38, %v56
    %v58 = vsel %vm55, %v57, %v53
    %v59 = vmul.f32 1.0, %v58
    %v60 = vrcp.pop %v42
    %v61 = vmul.f32 %v42, %v60
    %v62 = vsub.f32 1.0, %v61
    %v63 = vmul.f32 %v60, %v62
    %v64 = vadd.f32 %v60, %v63
    %vm65 = vweird.f32 %v42
    %vm66 = vweird.f32 %v60
    %vm67 = vmor %vm65, %vm66
    %v68 = vsel %vm67, %v60, %v64
    %v69 = vand.u32 2147483647, %v42
    %vm70 = vcmp.eq.f32.partialorder %v69, 8.507059e+37
    %v71 = vand.u32 %v42, 2147483648
    %v72 = vor.u32 1.1754944e-38, %v71
    %v73 = vsel %vm70, %v72, %v68
    %v74 = vmul.f32 1.0, %v73
    %v75 = vrcp.pop %v43
    %v76 = vmul.f32 %v43, %v75
    %v77 = vsub.f32 1.0, %v76
    %v78 = vmul.f32 %v75, %v77
    %v79 = vadd.f32 %v75, %v78
    %vm80 = vweird.f32 %v43
    %vm81 = vweird.f32 %v75
    %vm82 = vmor %vm80, %vm81
    %v83 = vsel %vm82, %v75, %v79
    %v84 = vand.u32 2147483647, %v43
    %vm85 = vcmp.eq.f32.partialorder %v84, 8.507059e+37
    %v86 = vand.u32 %v43, 2147483648
    %v87 = vor.u32 1.1754944e-38, %v86
    %v88 = vsel %vm85, %v87, %v83
    %v89 = vmul.f32 1.0, %v88
    %v90 = vrcp.pop %v44
    %v91 = vmul.f32 %v44, %v90
    %v92 = vsub.f32 1.0, %v91
    %v93 = vmul.f32 %v90, %v92
    %v94 = vadd.f32 %v90, %v93
    %vm95 = vweird.f32 %v44
    %vm96 = vweird.f32 %v90
    %vm97 = vmor %vm95, %vm96
    %v98 = vsel %vm97, %v90, %v94
    %v99 = vand.u32 2147483647, %v44
    %vm100 = vcmp.eq.f32.partialorder %v99, 8.507059e+37
    %v101 = vand.u32 %v44, 2147483648
    %v102 = vor.u32 1.1754944e-38, %v101
    %v103 = vsel %vm100, %v102, %v98
    %v104 = vmul.f32 1.0, %v103
    %v105 = vmul.f32 %v25, %v59
    %v106 = vmul.f32 %v26, %v74
    %v107 = vmul.f32 %v27, %v89
    %v108 = vmul.f32 %v28, %v104
    %109 = vst [vmem:[#allocation5] sm:$0xff] %v105
    %110 = vst [vmem:[#allocation5 + $0x8] sm:$0xff] %v106
    %111 = vst [vmem:[#allocation5 + $0x10] sm:$0xff] %v107
    %112 = vst [vmem:[#allocation5 + $0x18] sm:$0xff] %v108
    // Predicated region
    $region10: #{tpu_custom_call.1} parent=1 // pred_check
      _
    $region11: #{tpu_custom_call.1} parent=1 // pred_check_branch
      %114 = sbr.rel (0) target = $region13
    $region12: #{tpu_custom_call.1} parent=1 // pred_region
      %116 = vsyncadd [#allocation4], 384
      %s117 = sshll.u32 [#allocation5], 4
      %s118 = int_to_ptr.vmem [resolvable:$true] %s117
      %s119 = sshll.u32 %s1, 4
      %s120 = int_to_ptr.hbm [resolvable:$true] %s119
      %125 = dma.vmem_to_hbm [thread:$0]  %s118, 128, %s120, [#allocation4], 128, 128, 8
    $region13: #{tpu_custom_call.1} parent=1 // pred_fallthru
      _
    // Predicated region
    $region14: #{tpu_custom_call.1} parent=1 // pred_check
      _
    $region15: #{tpu_custom_call.1} parent=1 // pred_check_branch
      %127 = sbr.rel (0) target = $region17
    $region16: #{tpu_custom_call.1} parent=1 // pred_region
      %129 = dma.done [#allocation4], 512
    $region17: #{tpu_custom_call.1} parent=1 // pred_fallthru
      _
    %130 = vsyncpa [#allocation3], 1
    %131 = vsyncpa [#allocation4], 1

</llo_original>
